<compile_context>
chip_gen: v5e
topology: v5e:2x2
jax: 0.10.0
libtpu: 0.0.40
codegen_flags: <defaults>
</compile_context>

<pallas_src>
import jax
import jax.numpy as jnp
from jax.experimental import pallas as pl
from jax.experimental.pallas import tpu as pltpu


def _round_up(v, m):
    return -(-v // m) * m


# --------------------------------------------------------------------------
# Kernel: one batch tile, whole (packed) weight set resident in VMEM.
# --------------------------------------------------------------------------
def _mxu_dot(a, w):
    """MXU matmul with f32 accumulation.  The activation is cast only when the
    weight really has a different dtype, so the f32 path emits zero casts and
    keeps the saturating VPU/EUP slot clean (important on v5e)."""
    if a.dtype != w.dtype:
        a = a.astype(w.dtype)
    return jnp.dot(a, w, preferred_element_type=jnp.float32)


def nam_kernel(x_ref, w1_ref, b1_ref, w2_ref, b2_ref, w3_ref, b3_ref,
               w4_ref, o_ref):
    # Layer 1: per-feature Linear(1, NU) == x @ block_diag(W1 rows); + cos.
    h = jnp.cos(_mxu_dot(x_ref[...], w1_ref[...]) + b1_ref[...])
    # Layers 2/3: per-feature Linear == block-diagonal matmul; + cos.
    h = jnp.cos(_mxu_dot(h, w2_ref[...]) + b2_ref[...])
    h = jnp.cos(_mxu_dot(h, w3_ref[...]) + b3_ref[...])
    # Final per-feature Linear(H1, 1, bias=False); W4 is zero-padded along the
    # lane axis, so this is one MXU pass and one lane-dense (TB, >=128) store.
    o_ref[...] = _mxu_dot(h, w4_ref[...]).astype(o_ref.dtype)


# --------------------------------------------------------------------------
# Wrapper: batch grid + resident weights.
# --------------------------------------------------------------------------
def _choose_tb(B):
    """Batch tile: sublane-aligned, >=2 grid steps when B allows (v7x megacore
    sharding), capped at 2048 rows (intermediates stay small in VMEM and the
    ~0.35 us per-grid-step overhead is amortized)."""
    if B <= 8:
        return B
    tb = _round_up(-(-B // 2), 8)       # ceil(B/2), rounded up to sublane mult
    return min(tb, 2048)


def nam_forward(x, packed_params):
    """x: (B, F) float32.  packed_params: output of pack_params()."""
    B, F = x.shape
    out_pad = packed_params[-1].shape[1]          # padded output lane width

    TB = _choose_tb(B)
    grid = (pl.cdiv(B, TB),)

    in_spec = pl.BlockSpec((TB, F), lambda i: (i, 0))
    out_spec = pl.BlockSpec((TB, out_pad), lambda i: (i, 0))
    # Weights: full-array blocks, constant index map -> resident across grid.
    weight_specs = [pl.BlockSpec(p.shape, lambda i: (0, 0))
                    for p in packed_params]

    weight_bytes = sum(int(p.size) * p.dtype.itemsize for p in packed_params)
    if weight_bytes > (48 << 20):
        # TODO(synk): for large F the O(F^2) block-diagonal packing outgrows
        # VMEM; switch to a feature-group grid axis with per-group dense tiles.
        raise ValueError("packed NAM weights too large for a weights-resident "
                         "Pallas kernel; use a feature-group grid instead")

    # Rough VMEM budget: resident weights + double-buffered x/o tiles + the
    # largest live f32 intermediates in the body.  Only raise the scoped
    # limit when the default (16/32 MiB) would be exceeded.
    max_cols = max(p.shape[1] for p in packed_params)
    vmem_est = (weight_bytes
                + 2 * 2 * TB * (F + out_pad) * 4
                + 3 * TB * max_cols * 4)
    vmem_limit = None
    if vmem_est > (16 << 20):
        vmem_limit = min(_round_up(vmem_est + (4 << 20), 1 << 20), 64 << 20)

    out = pl.pallas_call(
        nam_kernel,
        out_shape=jax.ShapeDtypeStruct((B, out_pad), jnp.float32),
        grid_spec=pltpu.PrefetchScalarGridSpec(
            num_scalar_prefetch=0,
            grid=grid,
            in_specs=[in_spec] + weight_specs,
            out_specs=out_spec,
        ),
        compiler_params=pltpu.CompilerParams(
            dimension_semantics=("parallel",),   # megacore sharding on v7x
            vmem_limit_bytes=vmem_limit),
    )(x, *packed_params)
    return out[:, :F]                            # drop the lane padding


# --------------------------------------------------------------------------
# Parameter construction / packing.
# --------------------------------------------------------------------------
def init_params(key, num_inputs, num_units, hidden_sizes):
    """Deterministic synthetic per-feature weights, stacked along F.
    NOTE: all features share the same layer sizes so they stack cleanly."""
    # TODO(synk): heterogeneous num_units per feature would need ragged packing.
    nu = num_units
    h0, h1 = hidden_sizes
    ks = jax.random.split(key, 7)
    s = 0.5
    W1 = s * jax.random.normal(ks[0], (num_inputs, nu), jnp.float32)
    B1 = s * jax.random.normal(ks[1], (num_inputs, nu), jnp.float32)
    W2 = s * jax.random.normal(ks[2], (num_inputs, nu, h0), jnp.float32) / jnp.sqrt(nu)
    B2 = s * jax.random.normal(ks[3], (num_inputs, h0), jnp.float32)
    W3 = s * jax.random.normal(ks[4], (num_inputs, h0, h1), jnp.float32) / jnp.sqrt(h0)
    B3 = s * jax.random.normal(ks[5], (num_inputs, h1), jnp.float32)
    W4 = s * jax.random.normal(ks[6], (num_inputs, h1), jnp.float32) / jnp.sqrt(h1)
    return (W1, B1, W2, B2, W3, B3, W4)


def pack_params(stacked, mxu_dtype=jnp.float32):
    """Pack per-feature weights into block-diagonal matrices (exact reparam).

    mxu_dtype=jnp.bfloat16 puts only the two big inner matmuls (W2/W3) on the
    native-bf16 MXU path; W1 (applied to raw x) and W4 (output layer) stay in
    f32 since they dominate quantization error.  Default f32 keeps the kernel
    cast-free (best on v5e and for the VPU-bound regime at small F)."""
    W1, B1, W2, B2, W3, B3, W4 = stacked
    F_, NU = W1.shape
    H0 = W2.shape[2]
    H1 = W3.shape[2]

    bd = jax.scipy.linalg.block_diag
    W1_bd = bd(*[W1[i][None, :] for i in range(F_)]).astype(jnp.float32)  # (F, F*NU)
    W2_bd = bd(*[W2[i] for i in range(F_)]).astype(mxu_dtype)             # (F*NU, F*H0)
    W3_bd = bd(*[W3[i] for i in range(F_)]).astype(mxu_dtype)             # (F*H0, F*H1)
    W4_bd = bd(*[W4[i][:, None] for i in range(F_)]).astype(jnp.float32)  # (F*H1, F)

    # Zero-pad W4 on the lane axis so the final store is lane-dense (>=128).
    out_pad = max(128, _round_up(F_, 128))
    W4_pad = jnp.pad(W4_bd, ((0, 0), (0, out_pad - F_)))                  # (F*H1, out_pad)

    B1_f = B1.reshape(1, F_ * NU).astype(jnp.float32)
    B2_f = B2.reshape(1, F_ * H0).astype(jnp.float32)
    B3_f = B3.reshape(1, F_ * H1).astype(jnp.float32)
    return (W1_bd, B1_f, W2_bd, B2_f, W3_bd, B3_f, W4_pad)


# --------------------------------------------------------------------------
# Pure-JAX reference mirroring the PyTorch forward (eval mode).
# --------------------------------------------------------------------------
def nam_reference(x, stacked):
    W1, B1, W2, B2, W3, B3, W4 = stacked
    hp = jax.lax.Precision.HIGHEST
    outs = []
    for i in range(x.shape[1]):
        xi = x[:, i:i + 1]
        h = jnp.cos(xi * W1[i][None, :] + B1[i][None, :])
        h = jnp.cos(jnp.dot(h, W2[i], precision=hp) + B2[i][None, :])
        h = jnp.cos(jnp.dot(h, W3[i], precision=hp) + B3[i][None, :])
        outs.append(jnp.sum(h * W4[i][None, :], axis=-1, keepdims=True))
    return jnp.concatenate(outs, axis=-1)


if __name__ == "__main__":
    NUM_INPUTS = 4   # number of features
    NUM_UNITS = 32   # first hidden layer width (same for every feature)
    HIDDEN_SIZES = [64, 32]

    key = jax.random.PRNGKey(0)
    kx, kp, kx2 = jax.random.split(key, 3)
    stacked = init_params(kp, NUM_INPUTS, NUM_UNITS, HIDDEN_SIZES)

    # --- small batch, f32 path (exact block-diag repack) --------------------
    B = 8
    x = jax.random.normal(kx, (B, NUM_INPUTS), jnp.float32)
    ref = nam_reference(x, stacked)

    packed_f32 = pack_params(stacked, mxu_dtype=jnp.float32)
    out = nam_forward(x, packed_f32)
    jax.block_until_ready(out)
    assert out.shape == (B, NUM_INPUTS)
    assert jnp.allclose(out, ref, atol=1e-4, rtol=1e-4)

    # --- larger, non-multiple batch: exercises >=2 grid steps + partial tile
    B2 = 1000
    x2 = jax.random.normal(kx2, (B2, NUM_INPUTS), jnp.float32)
    ref2 = nam_reference(x2, stacked)
    out2 = nam_forward(x2, packed_f32)
    jax.block_until_ready(out2)
    assert out2.shape == (B2, NUM_INPUTS)
    assert jnp.allclose(out2, ref2, atol=1e-4, rtol=1e-4)

    # --- optional bf16-MXU path (W2/W3 only; W1/W4 stay f32) ----------------
    packed_bf16 = pack_params(stacked, mxu_dtype=jnp.bfloat16)
    out_bf16 = nam_forward(x, packed_bf16)
    jax.block_until_ready(out_bf16)
    assert out_bf16.shape == (B, NUM_INPUTS)
    assert float(jnp.max(jnp.abs(out_bf16 - ref))) < 0.05

    print("KERNEL_OK")
</pallas_src>

<mosaic_0001>
module attributes {stable_mosaic.version = 11 : i64} {
  func.func @nam_kernel(%arg0: i32, %arg1: memref<8x4xf32, #tpu.memory_space<vmem>>, %arg2: memref<4x128xf32, #tpu.memory_space<vmem>>, %arg3: memref<1x128xf32, #tpu.memory_space<vmem>>, %arg4: memref<128x256xf32, #tpu.memory_space<vmem>>, %arg5: memref<1x256xf32, #tpu.memory_space<vmem>>, %arg6: memref<256x128xf32, #tpu.memory_space<vmem>>, %arg7: memref<1x128xf32, #tpu.memory_space<vmem>>, %arg8: memref<128x128xf32, #tpu.memory_space<vmem>>, %arg9: memref<8x128xf32, #tpu.memory_space<vmem>>) attributes {dimension_semantics = [#tpu.dimension_semantics<parallel>], iteration_bounds = array<i64: 1>, scalar_prefetch = 0 : i64, scratch_operands = 0 : i64, tpu.core_type = #tpu.core_type<tc>, window_params = [{transform_indices = @transform_0, window_bounds = array<i64: 8, 4>}, {pipeline_mode = #tpu.pipeline_mode<synchronous>, transform_indices = @transform_1, window_bounds = array<i64: 4, 128>}, {pipeline_mode = #tpu.pipeline_mode<synchronous>, transform_indices = @transform_2, window_bounds = array<i64: 1, 128>}, {pipeline_mode = #tpu.pipeline_mode<synchronous>, transform_indices = @transform_3, window_bounds = array<i64: 128, 256>}, {pipeline_mode = #tpu.pipeline_mode<synchronous>, transform_indices = @transform_4, window_bounds = array<i64: 1, 256>}, {pipeline_mode = #tpu.pipeline_mode<synchronous>, transform_indices = @transform_5, window_bounds = array<i64: 256, 128>}, {pipeline_mode = #tpu.pipeline_mode<synchronous>, transform_indices = @transform_6, window_bounds = array<i64: 1, 128>}, {pipeline_mode = #tpu.pipeline_mode<synchronous>, transform_indices = @transform_7, window_bounds = array<i64: 128, 128>}, {transform_indices = @transform_8, window_bounds = array<i64: 8, 128>}]} {
    %c0 = arith.constant 0 : index
    %c0_0 = arith.constant 0 : index
    %0 = vector.load %arg1[%c0, %c0_0] : memref<8x4xf32, #tpu.memory_space<vmem>>, vector<8x4xf32>
    %c0_1 = arith.constant 0 : index
    %c0_2 = arith.constant 0 : index
    %1 = vector.load %arg2[%c0_1, %c0_2] : memref<4x128xf32, #tpu.memory_space<vmem>>, vector<4x128xf32>
    %cst = arith.constant dense<0.000000e+00> : vector<8x128xf32>
    %2 = tpu.matmul %0, %1, %cst {dimension_numbers = #tpu.dot_dimension_numbers<[1], [0], [0], [1], [0, 0, 1, 1], [], []>} : vector<8x4xf32>, vector<4x128xf32>, vector<8x128xf32> -> vector<8x128xf32>
    %c0_3 = arith.constant 0 : index
    %c0_4 = arith.constant 0 : index
    %3 = vector.load %arg3[%c0_3, %c0_4] : memref<1x128xf32, #tpu.memory_space<vmem>>, vector<1x128xf32>
    %4 = vector.broadcast %3 : vector<1x128xf32> to vector<8x128xf32>
    %5 = arith.addf %2, %4 : vector<8x128xf32>
    %6 = math.cos %5 : vector<8x128xf32>
    %c0_5 = arith.constant 0 : index
    %c0_6 = arith.constant 0 : index
    %7 = vector.load %arg4[%c0_5, %c0_6] : memref<128x256xf32, #tpu.memory_space<vmem>>, vector<128x256xf32>
    %cst_7 = arith.constant dense<0.000000e+00> : vector<8x256xf32>
    %8 = tpu.matmul %6, %7, %cst_7 {dimension_numbers = #tpu.dot_dimension_numbers<[1], [0], [0], [1], [0, 0, 1, 1], [], []>} : vector<8x128xf32>, vector<128x256xf32>, vector<8x256xf32> -> vector<8x256xf32>
    %c0_8 = arith.constant 0 : index
    %c0_9 = arith.constant 0 : index
    %9 = vector.load %arg5[%c0_8, %c0_9] : memref<1x256xf32, #tpu.memory_space<vmem>>, vector<1x256xf32>
    %10 = vector.broadcast %9 : vector<1x256xf32> to vector<8x256xf32>
    %11 = arith.addf %8, %10 : vector<8x256xf32>
    %12 = math.cos %11 : vector<8x256xf32>
    %c0_10 = arith.constant 0 : index
    %c0_11 = arith.constant 0 : index
    %13 = vector.load %arg6[%c0_10, %c0_11] : memref<256x128xf32, #tpu.memory_space<vmem>>, vector<256x128xf32>
    %cst_12 = arith.constant dense<0.000000e+00> : vector<8x128xf32>
    %14 = tpu.matmul %12, %13, %cst_12 {dimension_numbers = #tpu.dot_dimension_numbers<[1], [0], [0], [1], [0, 0, 1, 1], [], []>} : vector<8x256xf32>, vector<256x128xf32>, vector<8x128xf32> -> vector<8x128xf32>
    %c0_13 = arith.constant 0 : index
    %c0_14 = arith.constant 0 : index
    %15 = vector.load %arg7[%c0_13, %c0_14] : memref<1x128xf32, #tpu.memory_space<vmem>>, vector<1x128xf32>
    %16 = vector.broadcast %15 : vector<1x128xf32> to vector<8x128xf32>
    %17 = arith.addf %14, %16 : vector<8x128xf32>
    %18 = math.cos %17 : vector<8x128xf32>
    %c0_15 = arith.constant 0 : index
    %c0_16 = arith.constant 0 : index
    %19 = vector.load %arg8[%c0_15, %c0_16] : memref<128x128xf32, #tpu.memory_space<vmem>>, vector<128x128xf32>
    %cst_17 = arith.constant dense<0.000000e+00> : vector<8x128xf32>
    %20 = tpu.matmul %18, %19, %cst_17 {dimension_numbers = #tpu.dot_dimension_numbers<[1], [0], [0], [1], [0, 0, 1, 1], [], []>} : vector<8x128xf32>, vector<128x128xf32>, vector<8x128xf32> -> vector<8x128xf32>
    %c0_18 = arith.constant 0 : index
    %c0_19 = arith.constant 0 : index
    %21 = vector.load %arg9[%c0_18, %c0_19] : memref<8x128xf32, #tpu.memory_space<vmem>>, vector<8x128xf32>
    tpu.vector_store %arg9[%c0_18, %c0_19], %20 {strides = array<i32>} : memref<8x128xf32, #tpu.memory_space<vmem>>, vector<8x128xf32>,
    return
  }
  func.func @transform_0(%arg0: i32) -> (i32, i32) {
    %c0_i32 = arith.constant 0 : i32
    %c0_i32_0 = arith.constant 0 : i32
    return %arg0, %c0_i32 : i32, i32
  }
  func.func @transform_1(%arg0: i32) -> (i32, i32) {
    %c0_i32 = arith.constant 0 : i32
    %c0_i32_0 = arith.constant 0 : i32
    %c0_i32_1 = arith.constant 0 : i32
    return %c0_i32, %c0_i32_0 : i32, i32
  }
  func.func @transform_2(%arg0: i32) -> (i32, i32) {
    %c0_i32 = arith.constant 0 : i32
    %c0_i32_0 = arith.constant 0 : i32
    %c0_i32_1 = arith.constant 0 : i32
    return %c0_i32, %c0_i32_0 : i32, i32
  }
  func.func @transform_3(%arg0: i32) -> (i32, i32) {
    %c0_i32 = arith.constant 0 : i32
    %c0_i32_0 = arith.constant 0 : i32
    %c0_i32_1 = arith.constant 0 : i32
    return %c0_i32, %c0_i32_0 : i32, i32
  }
  func.func @transform_4(%arg0: i32) -> (i32, i32) {
    %c0_i32 = arith.constant 0 : i32
    %c0_i32_0 = arith.constant 0 : i32
    %c0_i32_1 = arith.constant 0 : i32
    return %c0_i32, %c0_i32_0 : i32, i32
  }
  func.func @transform_5(%arg0: i32) -> (i32, i32) {
    %c0_i32 = arith.constant 0 : i32
    %c0_i32_0 = arith.constant 0 : i32
    %c0_i32_1 = arith.constant 0 : i32
    return %c0_i32, %c0_i32_0 : i32, i32
  }
  func.func @transform_6(%arg0: i32) -> (i32, i32) {
    %c0_i32 = arith.constant 0 : i32
    %c0_i32_0 = arith.constant 0 : i32
    %c0_i32_1 = arith.constant 0 : i32
    return %c0_i32, %c0_i32_0 : i32, i32
  }
  func.func @transform_7(%arg0: i32) -> (i32, i32) {
    %c0_i32 = arith.constant 0 : i32
    %c0_i32_0 = arith.constant 0 : i32
    %c0_i32_1 = arith.constant 0 : i32
    return %c0_i32, %c0_i32_0 : i32, i32
  }
  func.func @transform_8(%arg0: i32) -> (i32, i32) {
    %c0_i32 = arith.constant 0 : i32
    %c0_i32_0 = arith.constant 0 : i32
    return %arg0, %c0_i32 : i32, i32
  }
}

</mosaic_0001>

<llo_original>
// kernel: tpu_custom_call.1
$region0: #{tpu_custom_call.1}
  #allocation0 [shape = 'u32[]', space=smem, size = 0x4, offset = 0x4, fixed_abs, tag = 'smem constant byte address 0x4 - core index']
  #allocation1 [shape = 'u32[72,128]{1,0:T(1,128)}', space=vmem, size = 0x9000, scoped, tag = 'internal scratch']
  %s0 = inlined_call_operand.vmem [shape: f32[8,4], index: 0, kind: input, shape index: {}]
  %s1 = inlined_call_operand.vmem [shape: f32[4,128], index: 1, kind: input, shape index: {}]
  %s2 = inlined_call_operand.vmem [shape: f32[1,128], index: 2, kind: input, shape index: {}]
  %s3 = inlined_call_operand.hbm [shape: f32[128,256], index: 3, kind: input, shape index: {}]
  %s4 = inlined_call_operand.vmem [shape: f32[1,256], index: 4, kind: input, shape index: {}]
  %s5 = inlined_call_operand.hbm [shape: f32[256,128], index: 5, kind: input, shape index: {}]
  %s6 = inlined_call_operand.vmem [shape: f32[1,128], index: 6, kind: input, shape index: {}]
  %s7 = inlined_call_operand.hbm [shape: f32[128,128], index: 7, kind: input, shape index: {}]
  %s8 = inlined_call_operand.hbm [shape: f32[8,128], index: 8, kind: output, shape index: {}]
  %s9 = sld [smem:[#allocation0]]
  $region54: #{tpu_custom_call.1} parent=0
    _
  %s11 = ssub.s32 1, %s9
  %s12 = scalar_select 0, %s11, %s9
  $region1: #{tpu_custom_call.1} parent=0
    #allocation2 [shape = 'u8[131072]{0}', space=vmem, size = 0x20000, scoped, tag = 'input window, operand 3, single buffered']
    #allocation3 [shape = 's32[1]{0}', space=sflag, size = 0x4, scoped, tag = 'scoped memory for tpu_custom_call.1']
    #allocation4 [shape = 's32[1]{0}', space=sflag, size = 0x4, scoped, tag = 'scoped memory for tpu_custom_call.1']
    #allocation5 [shape = 'u8[131072]{0}', space=vmem, size = 0x20000, scoped, tag = 'input window, operand 5, single buffered']
    #allocation6 [shape = 's32[1]{0}', space=sflag, size = 0x4, scoped, tag = 'scoped memory for tpu_custom_call.1']
    #allocation7 [shape = 'u8[65536]{0}', space=vmem, size = 0x10000, scoped, tag = 'input window, operand 7, single buffered']
    #allocation8 [shape = 'u8[4096]{0}', space=vmem, size = 0x1000, scoped, tag = 'output window, operand 0, single buffered']
    %13 = vsyncpa [#allocation3], 0
    %14 = vsyncpa [#allocation6], 0
    %15 = vsyncpa [#allocation4], 0
    // Predicated region
    $region2: #{tpu_custom_call.1} parent=1 // pred_check
      _
    $region3: #{tpu_custom_call.1} parent=1 // pred_check_branch
      %17 = sbr.rel (0) target = $region5
    $region4: #{tpu_custom_call.1} parent=1 // pred_region
      _
    $region5: #{tpu_custom_call.1} parent=1 // pred_fallthru
      _
    // Predicated region
    $region6: #{tpu_custom_call.1} parent=1 // pred_check
      _
    $region7: #{tpu_custom_call.1} parent=1 // pred_check_branch
      %19 = sbr.rel (0) target = $region9
    $region8: #{tpu_custom_call.1} parent=1 // pred_region
      _
    $region9: #{tpu_custom_call.1} parent=1 // pred_fallthru
      _
    // Predicated region
    $region10: #{tpu_custom_call.1} parent=1 // pred_check
      _
    $region11: #{tpu_custom_call.1} parent=1 // pred_check_branch
      %21 = sbr.rel (0) target = $region13
    $region12: #{tpu_custom_call.1} parent=1 // pred_region
      _
    $region13: #{tpu_custom_call.1} parent=1 // pred_fallthru
      _
    // Predicated region
    $region14: #{tpu_custom_call.1} parent=1 // pred_check
      _
    $region15: #{tpu_custom_call.1} parent=1 // pred_check_branch
      %23 = sbr.rel (0) target = $region17
    $region16: #{tpu_custom_call.1} parent=1 // pred_region
      %25 = vsyncadd [#allocation3], 0
      %s26 = sshll.u32 %s3, 4
      %s27 = int_to_ptr.hbm [resolvable:$true] %s26
      %s28 = sshll.u32 [#allocation2], 4
      %s29 = int_to_ptr.vmem [resolvable:$true] %s28
      %34 = dma.hbm_to_vmem [thread:$0]  %s27, 4096, %s29, [#allocation3], 256, 256, 16
    $region17: #{tpu_custom_call.1} parent=1 // pred_fallthru
      _
    // Predicated region
    $region18: #{tpu_custom_call.1} parent=1 // pred_check
      _
    $region19: #{tpu_custom_call.1} parent=1 // pred_check_branch
      %36 = sbr.rel (0) target = $region21
    $region20: #{tpu_custom_call.1} parent=1 // pred_region
      _
    $region21: #{tpu_custom_call.1} parent=1 // pred_fallthru
      _
    // Predicated region
    $region22: #{tpu_custom_call.1} parent=1 // pred_check
      _
    $region23: #{tpu_custom_call.1} parent=1 // pred_check_branch
      %38 = sbr.rel (0) target = $region25
    $region24: #{tpu_custom_call.1} parent=1 // pred_region
      %40 = vsyncadd [#allocation6], 0
      %s41 = sshll.u32 %s5, 4
      %s42 = int_to_ptr.hbm [resolvable:$true] %s41
      %s43 = sshll.u32 [#allocation5], 4
      %s44 = int_to_ptr.vmem [resolvable:$true] %s43
      %49 = dma.hbm_to_vmem [thread:$0]  %s42, 4096, %s44, [#allocation6], 128, 128, 8
    $region25: #{tpu_custom_call.1} parent=1 // pred_fallthru
      _
    // Predicated region
    $region26: #{tpu_custom_call.1} parent=1 // pred_check
      _
    $region27: #{tpu_custom_call.1} parent=1 // pred_check_branch
      %51 = sbr.rel (0) target = $region29
    $region28: #{tpu_custom_call.1} parent=1 // pred_region
      _
    $region29: #{tpu_custom_call.1} parent=1 // pred_fallthru
      _
    // Predicated region
    $region30: #{tpu_custom_call.1} parent=1 // pred_check
      _
    $region31: #{tpu_custom_call.1} parent=1 // pred_check_branch
      %53 = sbr.rel (0) target = $region33
    $region32: #{tpu_custom_call.1} parent=1 // pred_region
      %55 = vsyncadd [#allocation6], 0
      %s56 = sshll.u32 %s7, 4
      %s57 = int_to_ptr.hbm [resolvable:$true] %s56
      %s58 = sshll.u32 [#allocation7], 4
      %s59 = int_to_ptr.vmem [resolvable:$true] %s58
      %64 = dma.hbm_to_vmem [thread:$0]  %s57, 2048, %s59, [#allocation6], 128, 128, 8
    $region33: #{tpu_custom_call.1} parent=1 // pred_fallthru
      _
    // Predicated region
    $region34: #{tpu_custom_call.1} parent=1 // pred_check
      _
    $region35: #{tpu_custom_call.1} parent=1 // pred_check_branch
      %66 = sbr.rel (0) target = $region37
    $region36: #{tpu_custom_call.1} parent=1 // pred_region
      %68 = dma.done [#allocation3], 4096
    $region37: #{tpu_custom_call.1} parent=1 // pred_fallthru
      _
    // Predicated region
    $region38: #{tpu_custom_call.1} parent=1 // pred_check
      _
    $region39: #{tpu_custom_call.1} parent=1 // pred_check_branch
      %70 = sbr.rel (0) target = $region41
    $region40: #{tpu_custom_call.1} parent=1 // pred_region
      %72 = dma.done [#allocation6], 4096
    $region41: #{tpu_custom_call.1} parent=1 // pred_fallthru
      _
    // Predicated region
    $region42: #{tpu_custom_call.1} parent=1 // pred_check
      _
    $region43: #{tpu_custom_call.1} parent=1 // pred_check_branch
      %74 = sbr.rel (0) target = $region45
    $region44: #{tpu_custom_call.1} parent=1 // pred_region
      %76 = dma.done [#allocation6], 2048
    $region45: #{tpu_custom_call.1} parent=1 // pred_fallthru
      _
    %v77 = vld [vmem:[%s0] sm:$0xff]
    %v78 = vld [vmem:[%s1] sm:$0xf]
    %v79 = vld [vmem:[%s2] sm:$0x1]
    %v81 = vperm.slane %v79, 0
    %vm83 = vcmask 31744
    %v85 = vsel %vm83, %v77, 0
    %vm87 = vcmask 1043456
    %v89 = vsel %vm87, %v78, 0
    %91 = vmatpush.msra.mxu0 0.0
    %92 = vmatpush.msra.mxu0 0.0
    %93 = vmatpush.msra.mxu0 0.0
    %94 = vmatpush.msra.mxu0 0.0
    %95 = vmatpush.msra.mxu0 0.0
    %96 = vmatpush.msra.mxu0 0.0
    %97 = vmatpush.msra.mxu0 0.0
    %98 = vmatpush.msra.mxu0 0.0
    %99 = vmatpush.msra.mxu0 0.0
    %100 = vmatpush.msra.mxu0 0.0
    %101 = vmatpush.msra.mxu0 0.0
    %102 = vmatpush.msra.mxu0 0.0
    %103 = vmatpush.msra.mxu0 0.0
    %104 = vmatpush.msra.mxu0 0.0
    %105 = vmatpush.msra.mxu0 0.0
    %106 = vmatpush.msra.mxu0 %v89
    %107 = vmatmul.f32.gmra.mxu0 %v85
    %v108 = vpop.f32.mrf.mxu0
    %v109 = vadd.f32 %v81, %v108
    %110 = vdwg.mxu0
    %v111 = vand.u32 2147483647, %v109
    %vm112 = vcmp.le.f32.partialorder %v111, 0.7853982
    %vm113 = vcmp.lt.s32.totalorder %v109, 0
    %v114 = vand.u32 %v109, 2139095040
    %v115 = vshrl.u32 %v114, 23
    %v116 = vsub.s32 %v115, 127
    %v117 = vand.u32 2147483647, %v109
    %v118 = vand.u32 %v117, 8388607
    %v119 = vor.u32 %v118, 8388608
    %v120 = vsub.s32 0, %v119
    %v121 = vadd.s32 %v116, 1
    %vm122 = vcmp.gt.s32.totalorder %v121, 0
    %v123 = vsel %vm122, %v121, 0
    %v124 = vshrl.u32 %v123, 5
    %v125 = vand.u32 %v123, 31
    %v126 = vsub.s32 32, %v125
    %v127 = vshrl.u32 683565275, %v126
    %v128 = vshll.u32 683565275, %v125
    %v129 = vshrl.u32 2475754826, %v126
    %v130 = vor.u32 %v128, %v129
    %v131 = vshll.u32 2475754826, %v125
    %v132 = vshrl.u32 2131351028, %v126
    %v133 = vor.u32 %v131, %v132
    %v134 = vshll.u32 2131351028, %v125
    %v135 = vshrl.u32 2102212464, %v126
    %v136 = vor.u32 %v134, %v135
    %v137 = vshll.u32 2102212464, %v125
    %v138 = vshrl.u32 920167782, %v126
    %v139 = vor.u32 %v137, %v138
    %v140 = vshll.u32 920167782, %v125
    %v141 = vshrl.u32 1326507024, %v126
    %v142 = vor.u32 %v140, %v141
    %vm143 = vcmp.lt.s32.totalorder %v124, 1
    %vm144 = vcmp.lt.s32.totalorder %v124, 2
    %vm145 = vcmp.lt.s32.totalorder %v124, 3
    %vm146 = vcmp.lt.s32.totalorder %v124, 4
    %v147 = vsel %vm143, %v127, %v130
    %v148 = vsel %vm146, %v136, 2102212464
    %v149 = vsel %vm145, %v133, %v148
    %v150 = vsel %vm144, %v147, %v149
    %v151 = vsel %vm143, %v130, %v133
    %v152 = vsel %vm146, %v139, 920167782
    %v153 = vsel %vm145, %v136, %v152
    %v154 = vsel %vm144, %v151, %v153
    %v155 = vsel %vm143, %v133, %v136
    %v156 = vsel %vm146, %v142, 1326507024
    %v157 = vsel %vm145, %v139, %v156
    %v158 = vsel %vm144, %v155, %v157
    %v159 = vshll.u32 %v119, 8
    %v160 = vand.u32 %v159, 65535
    %v161 = vshrl.u32 %v159, 16
    %v162 = vand.u32 %v158, 65535
    %v163 = vshrl.u32 %v158, 16
    %v164 = vmul.u32 %v160, %v162
    %v165 = vmul.u32 %v160, %v163
    %v166 = vmul.u32 %v161, %v162
    %v167 = vmul.u32 %v161, %v163
    %v168 = vshll.u32 %v165, 16
    %v169 = vshrl.u32 %v165, 16
    %v170 = vshll.u32 %v166, 16
    %v171 = vshrl.u32 %v166, 16
    %vm172 = vc.u32 %v164, %v168
    %v173 = vsel %vm172, 1, 0
    %v174 = vadd.s32 %v164, %v168
    %v175 = vadd.s32 %v167, %v173
    %vm176 = vc.u32 %v174, %v170
    %v177 = vsel %vm176, 1, 0
    %v178 = vadd.s32 %v174, %v170
    %v179 = vadd.s32 %v175, %v177
    %v180 = vadd.s32 %v179, %v169
    %v181 = vadd.s32 %v180, %v171
    %v182 = vand.u32 %v159, 65535
    %v183 = vshrl.u32 %v159, 16
    %v184 = vand.u32 %v154, 65535
    %v185 = vshrl.u32 %v154, 16
    %v186 = vmul.u32 %v182, %v184
    %v187 = vmul.u32 %v182, %v185
    %v188 = vmul.u32 %v183, %v184
    %v189 = vmul.u32 %v183, %v185
    %v190 = vshll.u32 %v187, 16
    %v191 = vshrl.u32 %v187, 16
    %v192 = vshll.u32 %v188, 16
    %v193 = vshrl.u32 %v188, 16
    %vm194 = vc.u32 %v186, %v190
    %v195 = vsel %vm194, 1, 0
    %v196 = vadd.s32 %v186, %v190
    %v197 = vadd.s32 %v189, %v195
    %vm198 = vc.u32 %v196, %v192
    %v199 = vsel %vm198, 1, 0
    %v200 = vadd.s32 %v196, %v192
    %v201 = vadd.s32 %v197, %v199
    %v202 = vadd.s32 %v201, %v191
    %v203 = vadd.s32 %v202, %v193
    %v204 = vmul.u32 %v159, %v150
    %v205 = vadd.s32 %v181, %v200
    %vm206 = vc.u32 %v181, %v200
    %v207 = vadd.s32 %v203, 1
    %v208 = vsel %vm206, %v207, %v203
    %v209 = vadd.s32 %v204, %v208
    %v210 = vadd.s32 %v209, 536870912
    %v211 = vshrl.u32 %v210, 30
    %v212 = vshll.u32 %v211, 30
    %v213 = vsub.s32 %v209, %v212
    %vm214 = vcmp.lt.s32.totalorder %v213, 0
    %v215 = vsub.s32 0, %v213
    %v216 = vsel %vm214, %v215, %v213
    %v217 = vclz %v216
    %v218 = vsub.s32 %v217, 2
    %vm219 = vcmp.gt.s32.totalorder 0, %v218
    %v220 = vsel %vm219, 0, %v218
    %v221 = vsub.s32 32, %v220
    %v222 = vshll.u32 %v213, %v220
    %v223 = vshrl.u32 %v205, %v221
    %v224 = vor.u32 %v222, %v223
    %v225 = vsub.s32 4294967266, %v220
    %v226 = vadd.s32 %v225, 127
    %v227 = vshll.u32 %v226, 23
    %v228 = vor.u32 4788187, %v227
    %v229 = vand.u32 2147483647, %v228
    %v231 = vcvt.s32.f32 %v224
    %v232 = vmul.f32 %v231, %v229
    %v233 = vxor.u32 %v232, 2147483648
    %v234 = vsel %vm113, %v233, %v232
    %v235 = vsub.s32 4, %v211
    %v236 = vsel %vm113, %v235, %v211
    %v237 = vsel %vm112, %v109, %v234
    %v238 = vsel %vm112, 0, %v236
    %v239 = vmul.f32 %v237, %v237
    %v240 = vmul.f32 %v239, -0.001358992
    %v241 = vadd.f32 %v240, 0.041655596
    %v242 = vmul.f32 %v239, %v241
    %v243 = vadd.f32 %v242, -0.4999988
    %v244 = vmul.f32 %v239, %v243
    %v245 = vadd.f32 1.0, %v244
    %v246 = vmul.f32 %v237, %v237
    %v247 = vmul.f32 %v246, -0.00019511016
    %v248 = vadd.f32 %v247, 0.008332121
    %v249 = vmul.f32 %v246, %v248
    %v250 = vadd.f32 %v249, -0.16666654
    %v251 = vmul.f32 %v246, %v250
    %v252 = vadd.f32 %v251, 1.0
    %v253 = vmul.f32 %v252, %v237
    %vm254 = vweird.f32 %v109
    %v255 = vand.u32 %v238, 3
    %vm256 = vcmp.lt.s32.totalorder %v255, 2
    %vm257 = vcmp.eq.s32.totalorder %v255, 0
    %v258 = vxor.u32 %v253, 2147483648
    %v259 = vsel %vm257, %v245, %v258
    %vm260 = vcmp.eq.s32.totalorder %v255, 2
    %v261 = vxor.u32 %v245, 2147483648
    %v262 = vsel %vm260, %v261, %v253
    %v263 = vsel %vm256, %v259, %v262
    %v264 = vsel %vm254, nan, %v263
    %v265 = vld [vmem:[#allocation2] sm:$0xff]
    %v266 = vld [vmem:[#allocation2 + $0x8] sm:$0xff]
    %v267 = vld [vmem:[#allocation2 + $0x10] sm:$0xff]
    %v268 = vld [vmem:[#allocation2 + $0x18] sm:$0xff]
    %v269 = vld [vmem:[#allocation2 + $0x20] sm:$0xff]
    %v270 = vld [vmem:[#allocation2 + $0x28] sm:$0xff]
    %v271 = vld [vmem:[#allocation2 + $0x30] sm:$0xff]
    %v272 = vld [vmem:[#allocation2 + $0x38] sm:$0xff]
    %v273 = vld [vmem:[#allocation2 + $0x40] sm:$0xff]
    %v274 = vld [vmem:[#allocation2 + $0x48] sm:$0xff]
    %v275 = vld [vmem:[#allocation2 + $0x50] sm:$0xff]
    %v276 = vld [vmem:[#allocation2 + $0x58] sm:$0xff]
    %v277 = vld [vmem:[#allocation2 + $0x60] sm:$0xff]
    %v278 = vld [vmem:[#allocation2 + $0x68] sm:$0xff]
    %v279 = vld [vmem:[#allocation2 + $0x70] sm:$0xff]
    %v280 = vld [vmem:[#allocation2 + $0x78] sm:$0xff]
    %v281 = vld [vmem:[#allocation2 + $0x80] sm:$0xff]
    %v282 = vld [vmem:[#allocation2 + $0x88] sm:$0xff]
    %v283 = vld [vmem:[#allocation2 + $0x90] sm:$0xff]
    %v284 = vld [vmem:[#allocation2 + $0x98] sm:$0xff]
    %v285 = vld [vmem:[#allocation2 + $0xa0] sm:$0xff]
    %v286 = vld [vmem:[#allocation2 + $0xa8] sm:$0xff]
    %v287 = vld [vmem:[#allocation2 + $0xb0] sm:$0xff]
    %v288 = vld [vmem:[#allocation2 + $0xb8] sm:$0xff]
    %v289 = vld [vmem:[#allocation2 + $0xc0] sm:$0xff]
    %v290 = vld [vmem:[#allocation2 + $0xc8] sm:$0xff]
    %v291 = vld [vmem:[#allocation2 + $0xd0] sm:$0xff]
    %v292 = vld [vmem:[#allocation2 + $0xd8] sm:$0xff]
    %v293 = vld [vmem:[#allocation2 + $0xe0] sm:$0xff]
    %v294 = vld [vmem:[#allocation2 + $0xe8] sm:$0xff]
    %v295 = vld [vmem:[#allocation2 + $0xf0] sm:$0xff]
    %v296 = vld [vmem:[#allocation2 + $0xf8] sm:$0xff]
    %v297 = vld [vmem:[%s4] sm:$0x3]
    %v299 = vperm.slane %v297, 0
    %v300 = vperm.slane %v297, 1
    %303 = vmatpush.msra.mxu0 %v295
    %304 = vmatpush.msra.mxu0 %v293
    %305 = vmatpush.msra.mxu0 %v291
    %306 = vmatpush.msra.mxu0 %v289
    %307 = vmatpush.msra.mxu0 %v287
    %308 = vmatpush.msra.mxu0 %v285
    %309 = vmatpush.msra.mxu0 %v283
    %310 = vmatpush.msra.mxu0 %v281
    %311 = vmatpush.msra.mxu0 %v279
    %312 = vmatpush.msra.mxu0 %v277
    %313 = vmatpush.msra.mxu0 %v275
    %314 = vmatpush.msra.mxu0 %v273
    %315 = vmatpush.msra.mxu0 %v271
    %316 = vmatpush.msra.mxu0 %v269
    %317 = vmatpush.msra.mxu0 %v267
    %318 = vmatpush.msra.mxu0 %v265
    %319 = vmatmul.f32.gmra.mxu0 %v264
    %v320 = vpop.f32.mrf.mxu0
    %v321 = vadd.f32 %v299, %v320
    %322 = vdwg.mxu0
    %323 = vmatpush.msra.mxu0 %v296
    %324 = vmatpush.msra.mxu0 %v294
    %325 = vmatpush.msra.mxu0 %v292
    %326 = vmatpush.msra.mxu0 %v290
    %327 = vmatpush.msra.mxu0 %v288
    %328 = vmatpush.msra.mxu0 %v286
    %329 = vmatpush.msra.mxu0 %v284
    %330 = vmatpush.msra.mxu0 %v282
    %331 = vmatpush.msra.mxu0 %v280
    %332 = vmatpush.msra.mxu0 %v278
    %333 = vmatpush.msra.mxu0 %v276
    %334 = vmatpush.msra.mxu0 %v274
    %335 = vmatpush.msra.mxu0 %v272
    %336 = vmatpush.msra.mxu0 %v270
    %337 = vmatpush.msra.mxu0 %v268
    %338 = vmatpush.msra.mxu0 %v266
    %339 = vmatmul.f32.gmra.mxu0 %v264
    %v340 = vpop.f32.mrf.mxu0
    %v341 = vadd.f32 %v300, %v340
    %342 = vdwg.mxu0
    %v343 = vand.u32 2147483647, %v321
    %vm344 = vcmp.le.f32.partialorder %v343, 0.7853982
    %vm345 = vcmp.lt.s32.totalorder %v321, 0
    %v346 = vand.u32 %v321, 2139095040
    %v347 = vshrl.u32 %v346, 23
    %v348 = vsub.s32 %v347, 127
    %v349 = vand.u32 2147483647, %v321
    %v350 = vand.u32 %v349, 8388607
    %v351 = vor.u32 %v350, 8388608
    %v352 = vsub.s32 0, %v351
    %v353 = vadd.s32 %v348, 1
    %vm354 = vcmp.gt.s32.totalorder %v353, 0
    %v355 = vsel %vm354, %v353, 0
    %v356 = vshrl.u32 %v355, 5
    %v357 = vand.u32 %v355, 31
    %v358 = vsub.s32 32, %v357
    %v359 = vshrl.u32 683565275, %v358
    %v360 = vshll.u32 683565275, %v357
    %v361 = vshrl.u32 2475754826, %v358
    %v362 = vor.u32 %v360, %v361
    %v363 = vshll.u32 2475754826, %v357
    %v364 = vshrl.u32 2131351028, %v358
    %v365 = vor.u32 %v363, %v364
    %v366 = vshll.u32 2131351028, %v357
    %v367 = vshrl.u32 2102212464, %v358
    %v368 = vor.u32 %v366, %v367
    %v369 = vshll.u32 2102212464, %v357
    %v370 = vshrl.u32 920167782, %v358
    %v371 = vor.u32 %v369, %v370
    %v372 = vshll.u32 920167782, %v357
    %v373 = vshrl.u32 1326507024, %v358
    %v374 = vor.u32 %v372, %v373
    %vm375 = vcmp.lt.s32.totalorder %v356, 1
    %vm376 = vcmp.lt.s32.totalorder %v356, 2
    %vm377 = vcmp.lt.s32.totalorder %v356, 3
    %vm378 = vcmp.lt.s32.totalorder %v356, 4
    %v379 = vsel %vm375, %v359, %v362
    %v380 = vsel %vm378, %v368, 2102212464
    %v381 = vsel %vm377, %v365, %v380
    %v382 = vsel %vm376, %v379, %v381
    %v383 = vsel %vm375, %v362, %v365
    %v384 = vsel %vm378, %v371, 920167782
    %v385 = vsel %vm377, %v368, %v384
    %v386 = vsel %vm376, %v383, %v385
    %v387 = vsel %vm375, %v365, %v368
    %v388 = vsel %vm378, %v374, 1326507024
    %v389 = vsel %vm377, %v371, %v388
    %v390 = vsel %vm376, %v387, %v389
    %v391 = vshll.u32 %v351, 8
    %v392 = vand.u32 %v391, 65535
    %v393 = vshrl.u32 %v391, 16
    %v394 = vand.u32 %v390, 65535
    %v395 = vshrl.u32 %v390, 16
    %v396 = vmul.u32 %v392, %v394
    %v397 = vmul.u32 %v392, %v395
    %v398 = vmul.u32 %v393, %v394
    %v399 = vmul.u32 %v393, %v395
    %v400 = vshll.u32 %v397, 16
    %v401 = vshrl.u32 %v397, 16
    %v402 = vshll.u32 %v398, 16
    %v403 = vshrl.u32 %v398, 16
    %vm404 = vc.u32 %v396, %v400
    %v405 = vsel %vm404, 1, 0
    %v406 = vadd.s32 %v396, %v400
    %v407 = vadd.s32 %v399, %v405
    %vm408 = vc.u32 %v406, %v402
    %v409 = vsel %vm408, 1, 0
    %v410 = vadd.s32 %v406, %v402
    %v411 = vadd.s32 %v407, %v409
    %v412 = vadd.s32 %v411, %v401
    %v413 = vadd.s32 %v412, %v403
    %v414 = vand.u32 %v391, 65535
    %v415 = vshrl.u32 %v391, 16
    %v416 = vand.u32 %v386, 65535
    %v417 = vshrl.u32 %v386, 16
    %v418 = vmul.u32 %v414, %v416
    %v419 = vmul.u32 %v414, %v417
    %v420 = vmul.u32 %v415, %v416
    %v421 = vmul.u32 %v415, %v417
    %v422 = vshll.u32 %v419, 16
    %v423 = vshrl.u32 %v419, 16
    %v424 = vshll.u32 %v420, 16
    %v425 = vshrl.u32 %v420, 16
    %vm426 = vc.u32 %v418, %v422
    %v427 = vsel %vm426, 1, 0
    %v428 = vadd.s32 %v418, %v422
    %v429 = vadd.s32 %v421, %v427
    %vm430 = vc.u32 %v428, %v424
    %v431 = vsel %vm430, 1, 0
    %v432 = vadd.s32 %v428, %v424
    %v433 = vadd.s32 %v429, %v431
    %v434 = vadd.s32 %v433, %v423
    %v435 = vadd.s32 %v434, %v425
    %v436 = vmul.u32 %v391, %v382
    %v437 = vadd.s32 %v413, %v432
    %vm438 = vc.u32 %v413, %v432
    %v439 = vadd.s32 %v435, 1
    %v440 = vsel %vm438, %v439, %v435
    %v441 = vadd.s32 %v436, %v440
    %v442 = vadd.s32 %v441, 536870912
    %v443 = vshrl.u32 %v442, 30
    %v444 = vshll.u32 %v443, 30
    %v445 = vsub.s32 %v441, %v444
    %vm446 = vcmp.lt.s32.totalorder %v445, 0
    %v447 = vsub.s32 0, %v445
    %v448 = vsel %vm446, %v447, %v445
    %v449 = vclz %v448
    %v450 = vsub.s32 %v449, 2
    %vm451 = vcmp.gt.s32.totalorder 0, %v450
    %v452 = vsel %vm451, 0, %v450
    %v453 = vsub.s32 32, %v452
    %v454 = vshll.u32 %v445, %v452
    %v455 = vshrl.u32 %v437, %v453
    %v456 = vor.u32 %v454, %v455
    %v457 = vsub.s32 4294967266, %v452
    %v458 = vadd.s32 %v457, 127
    %v459 = vshll.u32 %v458, 23
    %v460 = vor.u32 4788187, %v459
    %v461 = vand.u32 2147483647, %v460
    %v463 = vcvt.s32.f32 %v456
    %v464 = vmul.f32 %v463, %v461
    %v465 = vxor.u32 %v464, 2147483648
    %v466 = vsel %vm345, %v465, %v464
    %v467 = vsub.s32 4, %v443
    %v468 = vsel %vm345, %v467, %v443
    %v469 = vsel %vm344, %v321, %v466
    %v470 = vsel %vm344, 0, %v468
    %v471 = vmul.f32 %v469, %v469
    %v472 = vmul.f32 %v471, -0.001358992
    %v473 = vadd.f32 %v472, 0.041655596
    %v474 = vmul.f32 %v471, %v473
    %v475 = vadd.f32 %v474, -0.4999988
    %v476 = vmul.f32 %v471, %v475
    %v477 = vadd.f32 1.0, %v476
    %v478 = vmul.f32 %v469, %v469
    %v479 = vmul.f32 %v478, -0.00019511016
    %v480 = vadd.f32 %v479, 0.008332121
    %v481 = vmul.f32 %v478, %v480
    %v482 = vadd.f32 %v481, -0.16666654
    %v483 = vmul.f32 %v478, %v482
    %v484 = vadd.f32 %v483, 1.0
    %v485 = vmul.f32 %v484, %v469
    %vm486 = vweird.f32 %v321
    %v487 = vand.u32 %v470, 3
    %vm488 = vcmp.lt.s32.totalorder %v487, 2
    %vm489 = vcmp.eq.s32.totalorder %v487, 0
    %v490 = vxor.u32 %v485, 2147483648
    %v491 = vsel %vm489, %v477, %v490
    %vm492 = vcmp.eq.s32.totalorder %v487, 2
    %v493 = vxor.u32 %v477, 2147483648
    %v494 = vsel %vm492, %v493, %v485
    %v495 = vsel %vm488, %v491, %v494
    %v496 = vsel %vm486, nan, %v495
    %v497 = vand.u32 2147483647, %v341
    %vm498 = vcmp.le.f32.partialorder %v497, 0.7853982
    %vm499 = vcmp.lt.s32.totalorder %v341, 0
    %v500 = vand.u32 %v341, 2139095040
    %v501 = vshrl.u32 %v500, 23
    %v502 = vsub.s32 %v501, 127
    %v503 = vand.u32 2147483647, %v341
    %v504 = vand.u32 %v503, 8388607
    %v505 = vor.u32 %v504, 8388608
    %v506 = vsub.s32 0, %v505
    %v507 = vadd.s32 %v502, 1
    %vm508 = vcmp.gt.s32.totalorder %v507, 0
    %v509 = vsel %vm508, %v507, 0
    %v510 = vshrl.u32 %v509, 5
    %v511 = vand.u32 %v509, 31
    %v512 = vsub.s32 32, %v511
    %v513 = vshrl.u32 683565275, %v512
    %v514 = vshll.u32 683565275, %v511
    %v515 = vshrl.u32 2475754826, %v512
    %v516 = vor.u32 %v514, %v515
    %v517 = vshll.u32 2475754826, %v511
    %v518 = vshrl.u32 2131351028, %v512
    %v519 = vor.u32 %v517, %v518
    %v520 = vshll.u32 2131351028, %v511
    %v521 = vshrl.u32 2102212464, %v512
    %v522 = vor.u32 %v520, %v521
    %v523 = vshll.u32 2102212464, %v511
    %v524 = vshrl.u32 920167782, %v512
    %v525 = vor.u32 %v523, %v524
    %v526 = vshll.u32 920167782, %v511
    %v527 = vshrl.u32 1326507024, %v512
    %v528 = vor.u32 %v526, %v527
    %vm529 = vcmp.lt.s32.totalorder %v510, 1
    %vm530 = vcmp.lt.s32.totalorder %v510, 2
    %vm531 = vcmp.lt.s32.totalorder %v510, 3
    %vm532 = vcmp.lt.s32.totalorder %v510, 4
    %v533 = vsel %vm529, %v513, %v516
    %v534 = vsel %vm532, %v522, 2102212464
    %v535 = vsel %vm531, %v519, %v534
    %v536 = vsel %vm530, %v533, %v535
    %v537 = vsel %vm529, %v516, %v519
    %v538 = vsel %vm532, %v525, 920167782
    %v539 = vsel %vm531, %v522, %v538
    %v540 = vsel %vm530, %v537, %v539
    %v541 = vsel %vm529, %v519, %v522
    %v542 = vsel %vm532, %v528, 1326507024
    %v543 = vsel %vm531, %v525, %v542
    %v544 = vsel %vm530, %v541, %v543
    %v545 = vshll.u32 %v505, 8
    %v546 = vand.u32 %v545, 65535
    %v547 = vshrl.u32 %v545, 16
    %v548 = vand.u32 %v544, 65535
    %v549 = vshrl.u32 %v544, 16
    %v550 = vmul.u32 %v546, %v548
    %v551 = vmul.u32 %v546, %v549
    %v552 = vmul.u32 %v547, %v548
    %v553 = vmul.u32 %v547, %v549
    %v554 = vshll.u32 %v551, 16
    %v555 = vshrl.u32 %v551, 16
    %v556 = vshll.u32 %v552, 16
    %v557 = vshrl.u32 %v552, 16
    %vm558 = vc.u32 %v550, %v554
    %v559 = vsel %vm558, 1, 0
    %v560 = vadd.s32 %v550, %v554
    %v561 = vadd.s32 %v553, %v559
    %vm562 = vc.u32 %v560, %v556
    %v563 = vsel %vm562, 1, 0
    %v564 = vadd.s32 %v560, %v556
    %v565 = vadd.s32 %v561, %v563
    %v566 = vadd.s32 %v565, %v555
    %v567 = vadd.s32 %v566, %v557
    %v568 = vand.u32 %v545, 65535
    %v569 = vshrl.u32 %v545, 16
    %v570 = vand.u32 %v540, 65535
    %v571 = vshrl.u32 %v540, 16
    %v572 = vmul.u32 %v568, %v570
    %v573 = vmul.u32 %v568, %v571
    %v574 = vmul.u32 %v569, %v570
    %v575 = vmul.u32 %v569, %v571
    %v576 = vshll.u32 %v573, 16
    %v577 = vshrl.u32 %v573, 16
    %v578 = vshll.u32 %v574, 16
    %v579 = vshrl.u32 %v574, 16
    %vm580 = vc.u32 %v572, %v576
    %v581 = vsel %vm580, 1, 0
    %v582 = vadd.s32 %v572, %v576
    %v583 = vadd.s32 %v575, %v581
    %vm584 = vc.u32 %v582, %v578
    %v585 = vsel %vm584, 1, 0
    %v586 = vadd.s32 %v582, %v578
    %v587 = vadd.s32 %v583, %v585
    %v588 = vadd.s32 %v587, %v577
    %v589 = vadd.s32 %v588, %v579
    %v590 = vmul.u32 %v545, %v536
    %v591 = vadd.s32 %v567, %v586
    %vm592 = vc.u32 %v567, %v586
    %v593 = vadd.s32 %v589, 1
    %v594 = vsel %vm592, %v593, %v589
    %v595 = vadd.s32 %v590, %v594
    %v596 = vadd.s32 %v595, 536870912
    %v597 = vshrl.u32 %v596, 30
    %v598 = vshll.u32 %v597, 30
    %v599 = vsub.s32 %v595, %v598
    %vm600 = vcmp.lt.s32.totalorder %v599, 0
    %v601 = vsub.s32 0, %v599
    %v602 = vsel %vm600, %v601, %v599
    %v603 = vclz %v602
    %v604 = vsub.s32 %v603, 2
    %vm605 = vcmp.gt.s32.totalorder 0, %v604
    %v606 = vsel %vm605, 0, %v604
    %v607 = vsub.s32 32, %v606
    %v608 = vshll.u32 %v599, %v606
    %v609 = vshrl.u32 %v591, %v607
    %v610 = vor.u32 %v608, %v609
    %v611 = vsub.s32 4294967266, %v606
    %v612 = vadd.s32 %v611, 127
    %v613 = vshll.u32 %v612, 23
    %v614 = vor.u32 4788187, %v613
    %v615 = vand.u32 2147483647, %v614
    %v617 = vcvt.s32.f32 %v610
    %v618 = vmul.f32 %v617, %v615
    %v619 = vxor.u32 %v618, 2147483648
    %v620 = vsel %vm499, %v619, %v618
    %v621 = vsub.s32 4, %v597
    %v622 = vsel %vm499, %v621, %v597
    %v623 = vsel %vm498, %v341, %v620
    %v624 = vsel %vm498, 0, %v622
    %v625 = vmul.f32 %v623, %v623
    %v626 = vmul.f32 %v625, -0.001358992
    %v627 = vadd.f32 %v626, 0.041655596
    %v628 = vmul.f32 %v625, %v627
    %v629 = vadd.f32 %v628, -0.4999988
    %v630 = vmul.f32 %v625, %v629
    %v631 = vadd.f32 1.0, %v630
    %v632 = vmul.f32 %v623, %v623
    %v633 = vmul.f32 %v632, -0.00019511016
    %v634 = vadd.f32 %v633, 0.008332121
    %v635 = vmul.f32 %v632, %v634
    %v636 = vadd.f32 %v635, -0.16666654
    %v637 = vmul.f32 %v632, %v636
    %v638 = vadd.f32 %v637, 1.0
    %v639 = vmul.f32 %v638, %v623
    %vm640 = vweird.f32 %v341
    %v641 = vand.u32 %v624, 3
    %vm642 = vcmp.lt.s32.totalorder %v641, 2
    %vm643 = vcmp.eq.s32.totalorder %v641, 0
    %v644 = vxor.u32 %v639, 2147483648
    %v645 = vsel %vm643, %v631, %v644
    %vm646 = vcmp.eq.s32.totalorder %v641, 2
    %v647 = vxor.u32 %v631, 2147483648
    %v648 = vsel %vm646, %v647, %v639
    %v649 = vsel %vm642, %v645, %v648
    %v650 = vsel %vm640, nan, %v649
    %v651 = vld [vmem:[#allocation5] sm:$0xff]
    %v652 = vld [vmem:[#allocation5 + $0x8] sm:$0xff]
    %v653 = vld [vmem:[#allocation5 + $0x10] sm:$0xff]
    %v654 = vld [vmem:[#allocation5 + $0x18] sm:$0xff]
    %v655 = vld [vmem:[#allocation5 + $0x20] sm:$0xff]
    %v656 = vld [vmem:[#allocation5 + $0x28] sm:$0xff]
    %v657 = vld [vmem:[#allocation5 + $0x30] sm:$0xff]
    %v658 = vld [vmem:[#allocation5 + $0x38] sm:$0xff]
    %v659 = vld [vmem:[#allocation5 + $0x40] sm:$0xff]
    %v660 = vld [vmem:[#allocation5 + $0x48] sm:$0xff]
    %v661 = vld [vmem:[#allocation5 + $0x50] sm:$0xff]
    %v662 = vld [vmem:[#allocation5 + $0x58] sm:$0xff]
    %v663 = vld [vmem:[#allocation5 + $0x60] sm:$0xff]
    %v664 = vld [vmem:[#allocation5 + $0x68] sm:$0xff]
    %v665 = vld [vmem:[#allocation5 + $0x70] sm:$0xff]
    %v666 = vld [vmem:[#allocation5 + $0x78] sm:$0xff]
    %v667 = vld [vmem:[#allocation5 + $0x80] sm:$0xff]
    %v668 = vld [vmem:[#allocation5 + $0x88] sm:$0xff]
    %v669 = vld [vmem:[#allocation5 + $0x90] sm:$0xff]
    %v670 = vld [vmem:[#allocation5 + $0x98] sm:$0xff]
    %v671 = vld [vmem:[#allocation5 + $0xa0] sm:$0xff]
    %v672 = vld [vmem:[#allocation5 + $0xa8] sm:$0xff]
    %v673 = vld [vmem:[#allocation5 + $0xb0] sm:$0xff]
    %v674 = vld [vmem:[#allocation5 + $0xb8] sm:$0xff]
    %v675 = vld [vmem:[#allocation5 + $0xc0] sm:$0xff]
    %v676 = vld [vmem:[#allocation5 + $0xc8] sm:$0xff]
    %v677 = vld [vmem:[#allocation5 + $0xd0] sm:$0xff]
    %v678 = vld [vmem:[#allocation5 + $0xd8] sm:$0xff]
    %v679 = vld [vmem:[#allocation5 + $0xe0] sm:$0xff]
    %v680 = vld [vmem:[#allocation5 + $0xe8] sm:$0xff]
    %v681 = vld [vmem:[#allocation5 + $0xf0] sm:$0xff]
    %v682 = vld [vmem:[#allocation5 + $0xf8] sm:$0xff]
    %v683 = vld [vmem:[%s6] sm:$0x1]
    %v685 = vperm.slane %v683, 0
    %687 = vmatpush.msra.mxu0 %v666
    %688 = vmatpush.msra.mxu0 %v665
    %689 = vmatpush.msra.mxu0 %v664
    %690 = vmatpush.msra.mxu0 %v663
    %691 = vmatpush.msra.mxu0 %v662
    %692 = vmatpush.msra.mxu0 %v661
    %693 = vmatpush.msra.mxu0 %v660
    %694 = vmatpush.msra.mxu0 %v659
    %695 = vmatpush.msra.mxu0 %v658
    %696 = vmatpush.msra.mxu0 %v657
    %697 = vmatpush.msra.mxu0 %v656
    %698 = vmatpush.msra.mxu0 %v655
    %699 = vmatpush.msra.mxu0 %v654
    %700 = vmatpush.msra.mxu0 %v653
    %701 = vmatpush.msra.mxu0 %v652
    %702 = vmatpush.msra.mxu0 %v651
    %703 = vmatmul.f32.gmra.mxu0 %v496
    %v704 = vpop.f32.mrf.mxu0
    %v705 = vadd.f32 %v685, %v704
    %706 = vdwg.mxu0
    %707 = vmatpush.msra.mxu0 %v682
    %708 = vmatpush.msra.mxu0 %v681
    %709 = vmatpush.msra.mxu0 %v680
    %710 = vmatpush.msra.mxu0 %v679
    %711 = vmatpush.msra.mxu0 %v678
    %712 = vmatpush.msra.mxu0 %v677
    %713 = vmatpush.msra.mxu0 %v676
    %714 = vmatpush.msra.mxu0 %v675
    %715 = vmatpush.msra.mxu0 %v674
    %716 = vmatpush.msra.mxu0 %v673
    %717 = vmatpush.msra.mxu0 %v672
    %718 = vmatpush.msra.mxu0 %v671
    %719 = vmatpush.msra.mxu0 %v670
    %720 = vmatpush.msra.mxu0 %v669
    %721 = vmatpush.msra.mxu0 %v668
    %722 = vmatpush.msra.mxu0 %v667
    %723 = vmatmul.f32.gmra.mxu0 %v650
    %v724 = vpop.f32.mrf.mxu0
    %v725 = vadd.f32 %v705, %v724
    %726 = vdwg.mxu0
    %v727 = vand.u32 2147483647, %v725
    %vm728 = vcmp.le.f32.partialorder %v727, 0.7853982
    %vm729 = vcmp.lt.s32.totalorder %v725, 0
    %v730 = vand.u32 %v725, 2139095040
    %v731 = vshrl.u32 %v730, 23
    %v732 = vsub.s32 %v731, 127
    %v733 = vand.u32 2147483647, %v725
    %v734 = vand.u32 %v733, 8388607
    %v735 = vor.u32 %v734, 8388608
    %v736 = vsub.s32 0, %v735
    %v737 = vadd.s32 %v732, 1
    %vm738 = vcmp.gt.s32.totalorder %v737, 0
    %v739 = vsel %vm738, %v737, 0
    %v740 = vshrl.u32 %v739, 5
    %v741 = vand.u32 %v739, 31
    %v742 = vsub.s32 32, %v741
    %v743 = vshrl.u32 683565275, %v742
    %v744 = vshll.u32 683565275, %v741
    %v745 = vshrl.u32 2475754826, %v742
    %v746 = vor.u32 %v744, %v745
    %v747 = vshll.u32 2475754826, %v741
    %v748 = vshrl.u32 2131351028, %v742
    %v749 = vor.u32 %v747, %v748
    %v750 = vshll.u32 2131351028, %v741
    %v751 = vshrl.u32 2102212464, %v742
    %v752 = vor.u32 %v750, %v751
    %v753 = vshll.u32 2102212464, %v741
    %v754 = vshrl.u32 920167782, %v742
    %v755 = vor.u32 %v753, %v754
    %v756 = vshll.u32 920167782, %v741
    %v757 = vshrl.u32 1326507024, %v742
    %v758 = vor.u32 %v756, %v757
    %vm759 = vcmp.lt.s32.totalorder %v740, 1
    %vm760 = vcmp.lt.s32.totalorder %v740, 2
    %vm761 = vcmp.lt.s32.totalorder %v740, 3
    %vm762 = vcmp.lt.s32.totalorder %v740, 4
    %v763 = vsel %vm759, %v743, %v746
    %v764 = vsel %vm762, %v752, 2102212464
    %v765 = vsel %vm761, %v749, %v764
    %v766 = vsel %vm760, %v763, %v765
    %v767 = vsel %vm759, %v746, %v749
    %v768 = vsel %vm762, %v755, 920167782
    %v769 = vsel %vm761, %v752, %v768
    %v770 = vsel %vm760, %v767, %v769
    %v771 = vsel %vm759, %v749, %v752
    %v772 = vsel %vm762, %v758, 1326507024
    %v773 = vsel %vm761, %v755, %v772
    %v774 = vsel %vm760, %v771, %v773
    %v775 = vshll.u32 %v735, 8
    %v776 = vand.u32 %v775, 65535
    %v777 = vshrl.u32 %v775, 16
    %v778 = vand.u32 %v774, 65535
    %v779 = vshrl.u32 %v774, 16
    %v780 = vmul.u32 %v776, %v778
    %v781 = vmul.u32 %v776, %v779
    %v782 = vmul.u32 %v777, %v778
    %v783 = vmul.u32 %v777, %v779
    %v784 = vshll.u32 %v781, 16
    %v785 = vshrl.u32 %v781, 16
    %v786 = vshll.u32 %v782, 16
    %v787 = vshrl.u32 %v782, 16
    %vm788 = vc.u32 %v780, %v784
    %v789 = vsel %vm788, 1, 0
    %v790 = vadd.s32 %v780, %v784
    %v791 = vadd.s32 %v783, %v789
    %vm792 = vc.u32 %v790, %v786
    %v793 = vsel %vm792, 1, 0
    %v794 = vadd.s32 %v790, %v786
    %v795 = vadd.s32 %v791, %v793
    %v796 = vadd.s32 %v795, %v785
    %v797 = vadd.s32 %v796, %v787
    %v798 = vand.u32 %v775, 65535
    %v799 = vshrl.u32 %v775, 16
    %v800 = vand.u32 %v770, 65535
    %v801 = vshrl.u32 %v770, 16
    %v802 = vmul.u32 %v798, %v800
    %v803 = vmul.u32 %v798, %v801
    %v804 = vmul.u32 %v799, %v800
    %v805 = vmul.u32 %v799, %v801
    %v806 = vshll.u32 %v803, 16
    %v807 = vshrl.u32 %v803, 16
    %v808 = vshll.u32 %v804, 16
    %v809 = vshrl.u32 %v804, 16
    %vm810 = vc.u32 %v802, %v806
    %v811 = vsel %vm810, 1, 0
    %v812 = vadd.s32 %v802, %v806
    %v813 = vadd.s32 %v805, %v811
    %vm814 = vc.u32 %v812, %v808
    %v815 = vsel %vm814, 1, 0
    %v816 = vadd.s32 %v812, %v808
    %v817 = vadd.s32 %v813, %v815
    %v818 = vadd.s32 %v817, %v807
    %v819 = vadd.s32 %v818, %v809
    %v820 = vmul.u32 %v775, %v766
    %v821 = vadd.s32 %v797, %v816
    %vm822 = vc.u32 %v797, %v816
    %v823 = vadd.s32 %v819, 1
    %v824 = vsel %vm822, %v823, %v819
    %v825 = vadd.s32 %v820, %v824
    %v826 = vadd.s32 %v825, 536870912
    %v827 = vshrl.u32 %v826, 30
    %v828 = vshll.u32 %v827, 30
    %v829 = vsub.s32 %v825, %v828
    %vm830 = vcmp.lt.s32.totalorder %v829, 0
    %v831 = vsub.s32 0, %v829
    %v832 = vsel %vm830, %v831, %v829
    %v833 = vclz %v832
    %v834 = vsub.s32 %v833, 2
    %vm835 = vcmp.gt.s32.totalorder 0, %v834
    %v836 = vsel %vm835, 0, %v834
    %v837 = vsub.s32 32, %v836
    %v838 = vshll.u32 %v829, %v836
    %v839 = vshrl.u32 %v821, %v837
    %v840 = vor.u32 %v838, %v839
    %v841 = vsub.s32 4294967266, %v836
    %v842 = vadd.s32 %v841, 127
    %v843 = vshll.u32 %v842, 23
    %v844 = vor.u32 4788187, %v843
    %v845 = vand.u32 2147483647, %v844
    %v847 = vcvt.s32.f32 %v840
    %v848 = vmul.f32 %v847, %v845
    %v849 = vxor.u32 %v848, 2147483648
    %v850 = vsel %vm729, %v849, %v848
    %v851 = vsub.s32 4, %v827
    %v852 = vsel %vm729, %v851, %v827
    %v853 = vsel %vm728, %v725, %v850
    %v854 = vsel %vm728, 0, %v852
    %v855 = vmul.f32 %v853, %v853
    %v856 = vmul.f32 %v855, -0.001358992
    %v857 = vadd.f32 %v856, 0.041655596
    %v858 = vmul.f32 %v855, %v857
    %v859 = vadd.f32 %v858, -0.4999988
    %v860 = vmul.f32 %v855, %v859
    %v861 = vadd.f32 1.0, %v860
    %v862 = vmul.f32 %v853, %v853
    %v863 = vmul.f32 %v862, -0.00019511016
    %v864 = vadd.f32 %v863, 0.008332121
    %v865 = vmul.f32 %v862, %v864
    %v866 = vadd.f32 %v865, -0.16666654
    %v867 = vmul.f32 %v862, %v866
    %v868 = vadd.f32 %v867, 1.0
    %v869 = vmul.f32 %v868, %v853
    %vm870 = vweird.f32 %v725
    %v871 = vand.u32 %v854, 3
    %vm872 = vcmp.lt.s32.totalorder %v871, 2
    %vm873 = vcmp.eq.s32.totalorder %v871, 0
    %v874 = vxor.u32 %v869, 2147483648
    %v875 = vsel %vm873, %v861, %v874
    %vm876 = vcmp.eq.s32.totalorder %v871, 2
    %v877 = vxor.u32 %v861, 2147483648
    %v878 = vsel %vm876, %v877, %v869
    %v879 = vsel %vm872, %v875, %v878
    %v880 = vsel %vm870, nan, %v879
    %v881 = vld [vmem:[#allocation7] sm:$0xff]
    %v882 = vld [vmem:[#allocation7 + $0x8] sm:$0xff]
    %v883 = vld [vmem:[#allocation7 + $0x10] sm:$0xff]
    %v884 = vld [vmem:[#allocation7 + $0x18] sm:$0xff]
    %v885 = vld [vmem:[#allocation7 + $0x20] sm:$0xff]
    %v886 = vld [vmem:[#allocation7 + $0x28] sm:$0xff]
    %v887 = vld [vmem:[#allocation7 + $0x30] sm:$0xff]
    %v888 = vld [vmem:[#allocation7 + $0x38] sm:$0xff]
    %v889 = vld [vmem:[#allocation7 + $0x40] sm:$0xff]
    %v890 = vld [vmem:[#allocation7 + $0x48] sm:$0xff]
    %v891 = vld [vmem:[#allocation7 + $0x50] sm:$0xff]
    %v892 = vld [vmem:[#allocation7 + $0x58] sm:$0xff]
    %v893 = vld [vmem:[#allocation7 + $0x60] sm:$0xff]
    %v894 = vld [vmem:[#allocation7 + $0x68] sm:$0xff]
    %v895 = vld [vmem:[#allocation7 + $0x70] sm:$0xff]
    %v896 = vld [vmem:[#allocation7 + $0x78] sm:$0xff]
    %897 = vmatpush.msra.mxu0 %v896
    %898 = vmatpush.msra.mxu0 %v895
    %899 = vmatpush.msra.mxu0 %v894
    %900 = vmatpush.msra.mxu0 %v893
    %901 = vmatpush.msra.mxu0 %v892
    %902 = vmatpush.msra.mxu0 %v891
    %903 = vmatpush.msra.mxu0 %v890
    %904 = vmatpush.msra.mxu0 %v889
    %905 = vmatpush.msra.mxu0 %v888
    %906 = vmatpush.msra.mxu0 %v887
    %907 = vmatpush.msra.mxu0 %v886
    %908 = vmatpush.msra.mxu0 %v885
    %909 = vmatpush.msra.mxu0 %v884
    %910 = vmatpush.msra.mxu0 %v883
    %911 = vmatpush.msra.mxu0 %v882
    %912 = vmatpush.msra.mxu0 %v881
    %913 = vmatmul.f32.gmra.mxu0 %v880
    %v914 = vpop.f32.mrf.mxu0
    %v915 = vadd.f32 0.0, %v914
    %916 = vdwg.mxu0
    %917 = vst [vmem:[#allocation8] sm:$0xff] %v915
    // Predicated region
    $region46: #{tpu_custom_call.1} parent=1 // pred_check
      _
    $region47: #{tpu_custom_call.1} parent=1 // pred_check_branch
      %919 = sbr.rel (0) target = $region49
    $region48: #{tpu_custom_call.1} parent=1 // pred_region
      %921 = vsyncadd [#allocation4], 0
      %s923 = sshll.u32 [#allocation8], 4
      %s924 = int_to_ptr.vmem [resolvable:$true] %s923
      %s925 = sshll.u32 %s8, 4
      %s926 = int_to_ptr.hbm [resolvable:$true] %s925
      %928 = dma.vmem_to_hbm [thread:$0]  %s924, 128, %s926, [#allocation4]
    $region49: #{tpu_custom_call.1} parent=1 // pred_fallthru
      _
    // Predicated region
    $region50: #{tpu_custom_call.1} parent=1 // pred_check
      _
    $region51: #{tpu_custom_call.1} parent=1 // pred_check_branch
      %930 = sbr.rel (0) target = $region53
    $region52: #{tpu_custom_call.1} parent=1 // pred_region
      %932 = dma.done [#allocation4], 128
    $region53: #{tpu_custom_call.1} parent=1 // pred_fallthru
      _
    %933 = vsyncpa [#allocation3], 1
    %934 = vsyncpa [#allocation6], 1
    %935 = vsyncpa [#allocation4], 1

</llo_original>
